<compile_context>
chip_gen: v7x
topology: tpu7x:2x2x1
jax: 0.10.0
libtpu: 0.0.40
codegen_flags: <defaults>
</compile_context>

<pallas_src>
import numpy as np
import jax
import jax.numpy as jnp
from jax.experimental import pallas as pl
from jax.experimental.pallas import tpu as pltpu

# ----------------------------------------------------------------------------
# Deterministic synthetic configuration.  These stand in for the smp_utils /
# config machinery the PyTorch module receives at __init__ time (predicates,
# masks, object-type bookkeeping).  They are init-time constants of the module,
# so they are baked statically into the kernel closure.
# ----------------------------------------------------------------------------
OBJ_TYPE_NAMES = ("agent", "key", "door", "enemy")            # obj_type_num = 4
OBJ_TYPE_INDICES = {"agent": [0], "key": [1], "door": [2], "enemy": [3]}
TYPE_CODES = (0, 1)              # this micro-program relates (agent, key)
PROP_CODE = 4                    # single prop code (len(prop_codes) == 1)
NUM_ACTIONS = 3
ACTION = (0.0, 1.0, 0.0)         # self.action, deterministic init
# Normalised action (action / (action + 1e-20)) -- init-time Python floats, so
# nothing non-scalar is captured by the kernel trace.
ACTION_NORM = tuple(float(a) / (float(a) + 1e-20) for a in ACTION)
MASK = (True, True, True, True)  # self.mask / obj_type_existance
# TODO(synk): the real `pred.eval` comes from smp_utils; replaced here with a
# deterministic synthetic predicate family: pred_i is satisfied iff
# |data_A - data_B| lies inside its parameter bound [pmin_i, pmax_i], and the
# fitted parameter value returned is |data_A - data_B| itself.
PRED_BOUNDS = ((0.0, 0.25), (0.0, 0.6), (0.1, 0.9))
P_SATISFACTION = (True, True, False)   # pred 2 takes the ones/zeros bypass branch
NUM_PREDS = len(PRED_BOUNDS)

LANE = 128
SUBLANE = 8
MAX_TILE_R = 512                 # 512 sublanes * 128 lanes = 64K batch elems/block


# ----------------------------------------------------------------------------
# Static row plan: which (object, property) entries the kernel actually reads.
# ----------------------------------------------------------------------------
def _build_row_plan():
    pairs = []

    def add(obj, prop):
        key = (obj, prop)
        if key not in pairs:
            pairs.append(key)
        return pairs.index(key)

    t1 = OBJ_TYPE_INDICES[OBJ_TYPE_NAMES[TYPE_CODES[0]]]
    t2 = OBJ_TYPE_INDICES[OBJ_TYPE_NAMES[TYPE_CODES[1]]]
    comb_rows = []
    for o1 in t1:
        for o2 in t2:
            comb_rows.append((add(o1, PROP_CODE), add(o2, PROP_CODE)))
    exist_rows = []
    for n_i, name in enumerate(OBJ_TYPE_NAMES):
        exist_rows.append(tuple(add(oi, n_i) for oi in OBJ_TYPE_INDICES[name]))
    return tuple(pairs), tuple(comb_rows), tuple(exist_rows)


ROW_PAIRS, COMB_ROWS, EXIST_ROWS = _build_row_plan()
NUM_ROWS = len(ROW_PAIRS)                    # 6 for this configuration
NUM_OUT_ROWS = NUM_ACTIONS + NUM_PREDS       # fused output: actions then p_values


def _round_up(n, m):
    return ((n + m - 1) // m) * m


# ----------------------------------------------------------------------------
# Pallas kernel: predicate evaluation + existence check + action-prob gating.
# ----------------------------------------------------------------------------
def _microprogram_kernel(rows_ref, out_ref):
    # rows_ref: (NUM_ROWS, TILE_R, 128) f32 -- gathered (object, property) rows,
    #           batch packed as (sublane, lane).
    # out_ref:  (NUM_OUT_ROWS, TILE_R, 128) f32 -- rows [0:A) action probs,
    #           rows [A:A+P) predicate p_values.
    tr, ln = rows_ref.shape[1], rows_ref.shape[2]
    zeros = jnp.zeros((tr, ln), dtype=jnp.float32)

    satisfies = None            # bool (TILE_R, 128): OR over object combinations
    pv_rows_last = None
    for (row_a, row_b) in COMB_ROWS:            # static python loops (init consts)
        diff = jnp.abs(rows_ref[row_a] - rows_ref[row_b])   # (TILE_R, 128)
        comb_sat = None
        pv_rows = []
        for p_i, (pmin, pmax) in enumerate(PRED_BOUNDS):
            if P_SATISFACTION[p_i]:
                sat = (diff >= pmin) & (diff <= pmax)
                comb_sat = sat if comb_sat is None else (comb_sat & sat)
                pv_rows.append(diff)
            else:
                # bypass branch: satisfied everywhere, p_values are zeros
                pv_rows.append(None)
        if comb_sat is None:
            comb_sat = jnp.ones((tr, ln), dtype=jnp.bool_)
        satisfies = comb_sat if satisfies is None else (satisfies | comb_sat)
        pv_rows_last = pv_rows

    # check_exists(): object-type existence bit x[:, obj, type_pos] > 0.8 must
    # match the micro-program mask for every object type (boolean masks only).
    exist_ok = None
    for n_i in range(len(OBJ_TYPE_NAMES)):
        type_exists = None
        for row in EXIST_ROWS[n_i]:
            e = rows_ref[row] > 0.8
            type_exists = e if type_exists is None else (type_exists & e)
        ok = type_exists if MASK[n_i] else jnp.logical_not(type_exists)
        exist_ok = ok if exist_ok is None else (exist_ok & ok)

    satisfies = satisfies & exist_ok                         # bool (TILE_R, 128)

    # action_probs[satisfies] += action ; /(self + 1e-20): only rows with a
    # nonzero normalised action need the mask; the rest are constant zeros.
    for a in range(NUM_ACTIONS):
        an = ACTION_NORM[a]
        if an == 0.0:
            out_ref[a] = zeros
        else:
            out_ref[a] = jnp.where(satisfies, jnp.float32(an), jnp.float32(0.0))

    # Predicate p_values of the last object combination (matches torch: p_spaces
    # is overwritten per combination; this config has a single combination).
    for p_i in range(NUM_PREDS):
        pv = pv_rows_last[p_i]
        out_ref[NUM_ACTIONS + p_i] = zeros if pv is None else pv


# ----------------------------------------------------------------------------
# Wrapper (glue: fused gather, (sublane, lane) packing, tiling, output split).
# ----------------------------------------------------------------------------
def micro_program_forward(x, tile_r=None, batch_major=False):
    """x: (B, O, P) float32 (PyTorch layout).

    Returns (action_probs, p_spaces).
      * batch_major=False (default, fast path): action_probs is lane-major
        (NUM_ACTIONS, B); values identical to the torch module, layout negotiated.
      * batch_major=True: action_probs is (B, NUM_ACTIONS) exactly like torch
        (costs one extra small transpose outside the kernel).
    p_spaces is a list of NUM_PREDS arrays of shape (1, B) in both modes.
    """
    B, O, P = x.shape
    x = x.astype(jnp.float32)

    # Single fused gather of only the rows the micro-program reads (6 of O*P),
    # then one small transpose of the 6-row slab to lane-major (batch on lanes).
    flat_idx = jnp.asarray([o * P + p for (o, p) in ROW_PAIRS], dtype=jnp.int32)
    gathered = jnp.take(x.reshape(B, O * P), flat_idx, axis=1)    # (B, NUM_ROWS)
    slab = gathered.T                                             # (NUM_ROWS, B)

    # Pad batch only to a (sublane*lane)=1024 boundary (<= 1023 extra lanes),
    # then pack batch as (sublane, lane): (NUM_ROWS, r_total, 128).
    b_pad = _round_up(B, SUBLANE * LANE)
    if b_pad != B:
        # Padded lanes get zeros -> existence check fails -> harmless; sliced off.
        slab = jnp.pad(slab, ((0, 0), (0, b_pad - B)))
    r_total = b_pad // LANE
    slab = slab.reshape(NUM_ROWS, r_total, LANE)

    if tile_r is None:
        # Biggest tile that still gives >=2 grid steps when possible (so the
        # "parallel" axis spans both v7x TensorCores), capped at MAX_TILE_R.
        tile_r = min(MAX_TILE_R, r_total,
                     max(SUBLANE, _round_up(pl.cdiv(r_total, 2), SUBLANE)))
    tile_r = min(_round_up(max(int(tile_r), 1), SUBLANE), r_total)

    grid = (pl.cdiv(r_total, tile_r),)   # partial edge block handled by Pallas
    out = pl.pallas_call(
        _microprogram_kernel,
        out_shape=jax.ShapeDtypeStruct((NUM_OUT_ROWS, r_total, LANE), jnp.float32),
        grid=grid,
        in_specs=[pl.BlockSpec((NUM_ROWS, tile_r, LANE), lambda i: (0, i, 0))],
        out_specs=pl.BlockSpec((NUM_OUT_ROWS, tile_r, LANE), lambda i: (0, i, 0)),
        compiler_params=pltpu.CompilerParams(
            dimension_semantics=("parallel",)),
    )(slab)

    # (NUM_OUT_ROWS, r_total, 128) -> (NUM_OUT_ROWS, b_pad): free contiguous reshape.
    flat = out.reshape(NUM_OUT_ROWS, b_pad)
    ap_lane_major = flat[:NUM_ACTIONS, :B]                 # (A, B)
    pv = flat[NUM_ACTIONS:, :B]                            # (NUM_PREDS, B)
    p_spaces = [pv[i][None, :] for i in range(NUM_PREDS)]

    action_probs = ap_lane_major.T if batch_major else ap_lane_major
    return action_probs, p_spaces


# ----------------------------------------------------------------------------
# Pure-JAX reference (mirrors the torch forward semantics) for a sanity check.
# ----------------------------------------------------------------------------
def _reference(x, action):
    B = x.shape[0]
    satisfies = jnp.zeros((B,), dtype=bool)
    t1 = OBJ_TYPE_INDICES[OBJ_TYPE_NAMES[TYPE_CODES[0]]]
    t2 = OBJ_TYPE_INDICES[OBJ_TYPE_NAMES[TYPE_CODES[1]]]
    pv_last = [None] * NUM_PREDS
    for o1 in t1:
        for o2 in t2:
            diff = jnp.abs(x[:, o1, PROP_CODE] - x[:, o2, PROP_CODE])
            comb = jnp.ones((B,), dtype=bool)
            for p_i, (pmin, pmax) in enumerate(PRED_BOUNDS):
                if P_SATISFACTION[p_i]:
                    sat, pv = (diff >= pmin) & (diff <= pmax), diff
                else:
                    sat, pv = jnp.ones((B,), bool), jnp.zeros((B,), jnp.float32)
                pv_last[p_i] = pv
                comb = comb & sat
            satisfies = satisfies | comb
    exist_ok = jnp.ones((B,), dtype=bool)
    for n_i, name in enumerate(OBJ_TYPE_NAMES):
        te = jnp.ones((B,), dtype=bool)
        for oi in OBJ_TYPE_INDICES[name]:
            te = te & (x[:, oi, n_i] > 0.8)
        exist_ok = exist_ok & (te == MASK[n_i])
    satisfies = satisfies & exist_ok
    ap = jnp.where(satisfies[:, None],
                   action[None, :] / (action[None, :] + 1e-20), 0.0)
    return ap, [p[None, :] for p in pv_last]


def _make_inputs(key, B, O, P):
    x = jax.random.uniform(key, (B, O, P), dtype=jnp.float32)
    # Make the type-indicator (existence) properties decisive: object o carries
    # its own type bit at property o (> 0.8), so check_exists passes for the
    # all-True mask on a good fraction of states.
    type_bit = (jnp.arange(O)[:, None] == jnp.arange(P)[None, :])
    x = jnp.where(type_bit[None, :, :], 0.95, x)
    return x


def _check(x, tile_r=None, batch_major=False):
    action = jnp.asarray(ACTION, dtype=jnp.float32)
    action_probs, p_spaces = micro_program_forward(
        x, tile_r=tile_r, batch_major=batch_major)
    action_probs = jax.block_until_ready(action_probs)
    ap_ref, pv_ref = _reference(x, action)
    want_ap = ap_ref if batch_major else ap_ref.T
    assert np.allclose(np.asarray(action_probs), np.asarray(want_ap), atol=1e-6)
    for got, want in zip(p_spaces, pv_ref):
        assert np.allclose(np.asarray(got), np.asarray(want), atol=1e-6)


if __name__ == "__main__":
    O, P = len(OBJ_TYPE_NAMES), 6
    key = jax.random.PRNGKey(0)
    k1, k2, k3 = jax.random.split(key, 3)

    # Small single-block batch (module-scale sanity check), lane-major output.
    _check(_make_inputs(k1, 8, O, P))
    # Multi-block grid (r_total = 24, tile_r = 8 -> 3 steps) + batch padding path.
    _check(_make_inputs(k2, 2500, O, P), tile_r=8)
    # Partial edge block (r_total = 24, tile_r = 16 -> 2 steps, last one partial).
    _check(_make_inputs(k2, 2500, O, P), tile_r=16)
    # Torch-contract (B, NUM_ACTIONS) layout path.
    _check(_make_inputs(k3, 300, O, P), batch_major=True)

    print("KERNEL_OK")
</pallas_src>

<mosaic_0001>
module attributes {stable_mosaic.version = 11 : i64} {
  func.func @_microprogram_kernel(%arg0: i32, %arg1: memref<6x8x128xf32, #tpu.memory_space<vmem>>, %arg2: memref<6x8x128xf32, #tpu.memory_space<vmem>>) attributes {dimension_semantics = [#tpu.dimension_semantics<parallel>], iteration_bounds = array<i64: 1>, scalar_prefetch = 0 : i64, scratch_operands = 0 : i64, tpu.core_type = #tpu.core_type<tc>, window_params = [{transform_indices = @transform_0, window_bounds = array<i64: 6, 8, 128>}, {transform_indices = @transform_1, window_bounds = array<i64: 6, 8, 128>}]} {
    %cst = arith.constant 0.000000e+00 : f32
    %0 = vector.broadcast %cst : f32 to vector<8x128xf32>
    %c0 = arith.constant 0 : index
    %c0_0 = arith.constant 0 : index
    %c0_1 = arith.constant 0 : index
    %1 = vector.load %arg1[%c0, %c0_0, %c0_1] : memref<6x8x128xf32, #tpu.memory_space<vmem>>, vector<1x8x128xf32>
    %2 = vector.shape_cast %1 : vector<1x8x128xf32> to vector<8x128xf32>
    %c1 = arith.constant 1 : index
    %c0_2 = arith.constant 0 : index
    %c0_3 = arith.constant 0 : index
    %3 = vector.load %arg1[%c1, %c0_2, %c0_3] : memref<6x8x128xf32, #tpu.memory_space<vmem>>, vector<1x8x128xf32>
    %4 = vector.shape_cast %3 : vector<1x8x128xf32> to vector<8x128xf32>
    %5 = arith.subf %2, %4 : vector<8x128xf32>
    %6 = math.absf %5 : vector<8x128xf32>
    %cst_4 = arith.constant 0.000000e+00 : f32
    %7 = vector.broadcast %cst_4 : f32 to vector<8x128xf32>
    %8 = arith.cmpf oge, %6, %7 : vector<8x128xf32>
    %cst_5 = arith.constant 2.500000e-01 : f32
    %9 = vector.broadcast %cst_5 : f32 to vector<8x128xf32>
    %10 = arith.cmpf ole, %6, %9 : vector<8x128xf32>
    %11 = arith.andi %8, %10 : vector<8x128xi1>
    %cst_6 = arith.constant 0.000000e+00 : f32
    %12 = vector.broadcast %cst_6 : f32 to vector<8x128xf32>
    %13 = arith.cmpf oge, %6, %12 : vector<8x128xf32>
    %cst_7 = arith.constant 6.000000e-01 : f32
    %14 = vector.broadcast %cst_7 : f32 to vector<8x128xf32>
    %15 = arith.cmpf ole, %6, %14 : vector<8x128xf32>
    %16 = arith.andi %13, %15 : vector<8x128xi1>
    %17 = arith.andi %11, %16 : vector<8x128xi1>
    %c2 = arith.constant 2 : index
    %c0_8 = arith.constant 0 : index
    %c0_9 = arith.constant 0 : index
    %18 = vector.load %arg1[%c2, %c0_8, %c0_9] : memref<6x8x128xf32, #tpu.memory_space<vmem>>, vector<1x8x128xf32>
    %19 = vector.shape_cast %18 : vector<1x8x128xf32> to vector<8x128xf32>
    %cst_10 = arith.constant 8.000000e-01 : f32
    %20 = vector.broadcast %cst_10 : f32 to vector<8x128xf32>
    %21 = arith.cmpf ogt, %19, %20 : vector<8x128xf32>
    %c3 = arith.constant 3 : index
    %c0_11 = arith.constant 0 : index
    %c0_12 = arith.constant 0 : index
    %22 = vector.load %arg1[%c3, %c0_11, %c0_12] : memref<6x8x128xf32, #tpu.memory_space<vmem>>, vector<1x8x128xf32>
    %23 = vector.shape_cast %22 : vector<1x8x128xf32> to vector<8x128xf32>
    %cst_13 = arith.constant 8.000000e-01 : f32
    %24 = vector.broadcast %cst_13 : f32 to vector<8x128xf32>
    %25 = arith.cmpf ogt, %23, %24 : vector<8x128xf32>
    %26 = arith.andi %21, %25 : vector<8x128xi1>
    %c4 = arith.constant 4 : index
    %c0_14 = arith.constant 0 : index
    %c0_15 = arith.constant 0 : index
    %27 = vector.load %arg1[%c4, %c0_14, %c0_15] : memref<6x8x128xf32, #tpu.memory_space<vmem>>, vector<1x8x128xf32>
    %28 = vector.shape_cast %27 : vector<1x8x128xf32> to vector<8x128xf32>
    %cst_16 = arith.constant 8.000000e-01 : f32
    %29 = vector.broadcast %cst_16 : f32 to vector<8x128xf32>
    %30 = arith.cmpf ogt, %28, %29 : vector<8x128xf32>
    %31 = arith.andi %26, %30 : vector<8x128xi1>
    %c5 = arith.constant 5 : index
    %c0_17 = arith.constant 0 : index
    %c0_18 = arith.constant 0 : index
    %32 = vector.load %arg1[%c5, %c0_17, %c0_18] : memref<6x8x128xf32, #tpu.memory_space<vmem>>, vector<1x8x128xf32>
    %33 = vector.shape_cast %32 : vector<1x8x128xf32> to vector<8x128xf32>
    %cst_19 = arith.constant 8.000000e-01 : f32
    %34 = vector.broadcast %cst_19 : f32 to vector<8x128xf32>
    %35 = arith.cmpf ogt, %33, %34 : vector<8x128xf32>
    %36 = arith.andi %31, %35 : vector<8x128xi1>
    %37 = arith.andi %17, %36 : vector<8x128xi1>
    %c0_20 = arith.constant 0 : index
    %c0_21 = arith.constant 0 : index
    %c0_22 = arith.constant 0 : index
    %38 = vector.load %arg2[%c0_20, %c0_21, %c0_22] : memref<6x8x128xf32, #tpu.memory_space<vmem>>, vector<1x8x128xf32>
    %39 = vector.shape_cast %38 : vector<1x8x128xf32> to vector<8x128xf32>
    %40 = vector.shape_cast %0 : vector<8x128xf32> to vector<1x8x128xf32>
    tpu.vector_store %arg2[%c0_20, %c0_21, %c0_22], %40 {strides = array<i32>} : memref<6x8x128xf32, #tpu.memory_space<vmem>>, vector<1x8x128xf32>,
    %cst_23 = arith.constant 1.000000e+00 : f32
    %cst_24 = arith.constant 0.000000e+00 : f32
    %41 = vector.broadcast %cst_23 : f32 to vector<8x128xf32>
    %42 = vector.broadcast %cst_24 : f32 to vector<8x128xf32>
    %43 = arith.select %37, %41, %42 : vector<8x128xi1>, vector<8x128xf32>
    %c1_25 = arith.constant 1 : index
    %c0_26 = arith.constant 0 : index
    %c0_27 = arith.constant 0 : index
    %44 = vector.load %arg2[%c1_25, %c0_26, %c0_27] : memref<6x8x128xf32, #tpu.memory_space<vmem>>, vector<1x8x128xf32>
    %45 = vector.shape_cast %44 : vector<1x8x128xf32> to vector<8x128xf32>
    %46 = vector.shape_cast %43 : vector<8x128xf32> to vector<1x8x128xf32>
    tpu.vector_store %arg2[%c1_25, %c0_26, %c0_27], %46 {strides = array<i32>} : memref<6x8x128xf32, #tpu.memory_space<vmem>>, vector<1x8x128xf32>,
    %c2_28 = arith.constant 2 : index
    %c0_29 = arith.constant 0 : index
    %c0_30 = arith.constant 0 : index
    %47 = vector.load %arg2[%c2_28, %c0_29, %c0_30] : memref<6x8x128xf32, #tpu.memory_space<vmem>>, vector<1x8x128xf32>
    %48 = vector.shape_cast %47 : vector<1x8x128xf32> to vector<8x128xf32>
    %49 = vector.shape_cast %0 : vector<8x128xf32> to vector<1x8x128xf32>
    tpu.vector_store %arg2[%c2_28, %c0_29, %c0_30], %49 {strides = array<i32>} : memref<6x8x128xf32, #tpu.memory_space<vmem>>, vector<1x8x128xf32>,
    %c3_31 = arith.constant 3 : index
    %c0_32 = arith.constant 0 : index
    %c0_33 = arith.constant 0 : index
    %50 = vector.load %arg2[%c3_31, %c0_32, %c0_33] : memref<6x8x128xf32, #tpu.memory_space<vmem>>, vector<1x8x128xf32>
    %51 = vector.shape_cast %50 : vector<1x8x128xf32> to vector<8x128xf32>
    %52 = vector.shape_cast %6 : vector<8x128xf32> to vector<1x8x128xf32>
    tpu.vector_store %arg2[%c3_31, %c0_32, %c0_33], %52 {strides = array<i32>} : memref<6x8x128xf32, #tpu.memory_space<vmem>>, vector<1x8x128xf32>,
    %c4_34 = arith.constant 4 : index
    %c0_35 = arith.constant 0 : index
    %c0_36 = arith.constant 0 : index
    %53 = vector.load %arg2[%c4_34, %c0_35, %c0_36] : memref<6x8x128xf32, #tpu.memory_space<vmem>>, vector<1x8x128xf32>
    %54 = vector.shape_cast %53 : vector<1x8x128xf32> to vector<8x128xf32>
    %55 = vector.shape_cast %6 : vector<8x128xf32> to vector<1x8x128xf32>
    tpu.vector_store %arg2[%c4_34, %c0_35, %c0_36], %55 {strides = array<i32>} : memref<6x8x128xf32, #tpu.memory_space<vmem>>, vector<1x8x128xf32>,
    %c5_37 = arith.constant 5 : index
    %c0_38 = arith.constant 0 : index
    %c0_39 = arith.constant 0 : index
    %56 = vector.load %arg2[%c5_37, %c0_38, %c0_39] : memref<6x8x128xf32, #tpu.memory_space<vmem>>, vector<1x8x128xf32>
    %57 = vector.shape_cast %56 : vector<1x8x128xf32> to vector<8x128xf32>
    %58 = vector.shape_cast %0 : vector<8x128xf32> to vector<1x8x128xf32>
    tpu.vector_store %arg2[%c5_37, %c0_38, %c0_39], %58 {strides = array<i32>} : memref<6x8x128xf32, #tpu.memory_space<vmem>>, vector<1x8x128xf32>,
    return
  }
  func.func @transform_0(%arg0: i32) -> (i32, i32, i32) {
    %c0_i32 = arith.constant 0 : i32
    %c0_i32_0 = arith.constant 0 : i32
    %c0_i32_1 = arith.constant 0 : i32
    return %c0_i32, %arg0, %c0_i32_0 : i32, i32, i32
  }
  func.func @transform_1(%arg0: i32) -> (i32, i32, i32) {
    %c0_i32 = arith.constant 0 : i32
    %c0_i32_0 = arith.constant 0 : i32
    %c0_i32_1 = arith.constant 0 : i32
    return %c0_i32, %arg0, %c0_i32_0 : i32, i32, i32
  }
}

</mosaic_0001>

<llo_original>
// kernel: tpu_custom_call.1
$region0: #{tpu_custom_call.1}
  #allocation0 [shape = 'u32[]', space=smem, size = 0x4, offset = 0x4, fixed_abs, tag = 'smem constant byte address 0x4 - core index']
  #allocation1 [shape = 'u32[144,128]{1,0:T(1,128)}', space=vmem, size = 0x12000, scoped, tag = 'internal scratch']
  %s0 = inlined_call_operand.hbm [shape: f32[6,8,128], index: 0, kind: input, shape index: {}]
  %s1 = inlined_call_operand.hbm [shape: f32[6,8,128], index: 1, kind: output, shape index: {}]
  %s2 = sld [smem:[#allocation0]]
  $region18: #{tpu_custom_call.1} parent=0
    _
  %s4 = ssub.s32 1, %s2
  %s5 = scalar_select 0, %s4, %s2
  $region1: #{tpu_custom_call.1} parent=0
    #allocation2 [shape = 'u8[24576]{0}', space=vmem, size = 0x6000, scoped, tag = 'input window, operand 0, single buffered']
    #allocation3 [shape = 's32[1]{0}', space=sflag, size = 0x4, scoped, tag = 'scoped memory for tpu_custom_call.1']
    #allocation4 [shape = 's32[1]{0}', space=sflag, size = 0x4, scoped, tag = 'scoped memory for tpu_custom_call.1']
    #allocation5 [shape = 'u8[24576]{0}', space=vmem, size = 0x6000, scoped, tag = 'output window, operand 0, single buffered']
    %6 = vsyncpa [#allocation3], 0
    %7 = vsyncpa [#allocation4], 0
    // Predicated region
    $region2: #{tpu_custom_call.1} parent=1 // pred_check
      _
    $region3: #{tpu_custom_call.1} parent=1 // pred_check_branch
      %9 = sbr.rel (0) target = $region5
    $region4: #{tpu_custom_call.1} parent=1 // pred_region
      %s11 = ssub.s32 768, 768
      %12 = vsyncadd [#allocation3], %s11
      %s13 = sshll.u32 [#allocation2], 4
      %s14 = int_to_ptr.vmem [resolvable:$true] %s13
      %19 = dma.hbm_to_vmem [thread:$0]  %s0, 768, %s14, [#allocation3], 128, 128, 8
    $region5: #{tpu_custom_call.1} parent=1 // pred_fallthru
      _
    // Predicated region
    $region6: #{tpu_custom_call.1} parent=1 // pred_check
      _
    $region7: #{tpu_custom_call.1} parent=1 // pred_check_branch
      %21 = sbr.rel (0) target = $region9
    $region8: #{tpu_custom_call.1} parent=1 // pred_region
      %22 = dma.done [#allocation3], 768
    $region9: #{tpu_custom_call.1} parent=1 // pred_fallthru
      _
    %v23 = vld [vmem:[#allocation2] sm:$0xff]
    %s24 = scalar_lea.vmem [#allocation2], 8
    %v25 = vld [vmem:[%s24] sm:$0xff]
    %v26 = vsub.f32 %v23, %v25
    %v27 = vand.u32 2147483647, %v26
    %vm28 = vcmp.ge.f32.partialorder %v27, 0.0
    %vm29 = vcmp.le.f32.partialorder %v27, 0.25
    %vm30 = vmand %vm28, %vm29
    %vm31 = vcmp.le.f32.partialorder %v27, 0.6
    %vm32 = vmand %vm28, %vm31
    %vm33 = vmand %vm30, %vm32
    %s34 = scalar_lea.vmem [#allocation2], 16
    %v35 = vld [vmem:[%s34] sm:$0xff]
    %vm36 = vcmp.gt.f32.partialorder %v35, 0.8
    %s37 = scalar_lea.vmem [#allocation2], 24
    %v38 = vld [vmem:[%s37] sm:$0xff]
    %vm39 = vcmp.gt.f32.partialorder %v38, 0.8
    %vm40 = vmand %vm36, %vm39
    %s41 = scalar_lea.vmem [#allocation2], 32
    %v42 = vld [vmem:[%s41] sm:$0xff]
    %vm43 = vcmp.gt.f32.partialorder %v42, 0.8
    %vm44 = vmand %vm40, %vm43
    %s45 = scalar_lea.vmem [#allocation2], 40
    %v46 = vld [vmem:[%s45] sm:$0xff]
    %vm47 = vcmp.gt.f32.partialorder %v46, 0.8
    %vm48 = vmand %vm44, %vm47
    %vm49 = vmand %vm33, %vm48
    %50 = vst [vmem:[#allocation5] sm:$0xff] 0.0
    %v51 = vsel %vm49, 1.0, 0.0
    %s52 = scalar_lea.vmem [#allocation5], 8
    %53 = vst [vmem:[%s52] sm:$0xff] %v51
    %s54 = scalar_lea.vmem [#allocation5], 16
    %55 = vst [vmem:[%s54] sm:$0xff] 0.0
    %s56 = scalar_lea.vmem [#allocation5], 24
    %57 = vst [vmem:[%s56] sm:$0xff] %v27
    %s58 = scalar_lea.vmem [#allocation5], 32
    %59 = vst [vmem:[%s58] sm:$0xff] %v27
    %s60 = scalar_lea.vmem [#allocation5], 40
    %61 = vst [vmem:[%s60] sm:$0xff] 0.0
    // Predicated region
    $region10: #{tpu_custom_call.1} parent=1 // pred_check
      _
    $region11: #{tpu_custom_call.1} parent=1 // pred_check_branch
      %63 = sbr.rel (0) target = $region13
    $region12: #{tpu_custom_call.1} parent=1 // pred_region
      %s65 = ssub.s32 768, 768
      %66 = vsyncadd [#allocation4], %s65
      %s67 = sshll.u32 [#allocation5], 4
      %s68 = int_to_ptr.vmem [resolvable:$true] %s67
      %73 = dma.vmem_to_hbm [thread:$0]  %s68, 768, %s1, [#allocation4], 128, 128, 8
    $region13: #{tpu_custom_call.1} parent=1 // pred_fallthru
      _
    // Predicated region
    $region14: #{tpu_custom_call.1} parent=1 // pred_check
      _
    $region15: #{tpu_custom_call.1} parent=1 // pred_check_branch
      %75 = sbr.rel (0) target = $region17
    $region16: #{tpu_custom_call.1} parent=1 // pred_region
      %76 = dma.done [#allocation4], 768
    $region17: #{tpu_custom_call.1} parent=1 // pred_fallthru
      _
    %77 = vsyncpa [#allocation3], 1
    %78 = vsyncpa [#allocation4], 1

</llo_original>
